<compile_context>
chip_gen: v5e
topology: v5e:2x2
jax: 0.10.0
libtpu: 0.0.40
codegen_flags: <defaults>
</compile_context>

<pallas_src>
import jax
import jax.numpy as jnp
from jax.experimental import pallas as pl
from jax.experimental.pallas import tpu as pltpu


def _uniform_shutter_kernel(sig_ref,      # SMEM (2,)  f32 : [sig_shot, sig_read]
                            video_ref,    # VMEM (1, T, tr, 128) f32
                            len_ref,      # VMEM (tr, 128) i32 : per-pixel exposure length
                            noise_ref,    # VMEM (1, tr, 128) f32 : standard normal draw
                            out_ref):     # VMEM (1, tr, 128) f32
    _, T, tr, _ = video_ref.shape
    lengths = len_ref[...]                               # (tr, 128) int32

    # measurement = sum_t(video * [t < lengths]);  the /lengths (post_process) and
    # *(lengths/8) (add_noise ratio) cancel exactly, leaving a single *0.125.
    # Unrolled T-step multiply-add chain on the VPU; mask built from `lengths`
    # in-kernel instead of streaming the dense (T,H,W) shutter from HBM.
    acc = jnp.zeros((tr, 128), jnp.float32)
    for t in range(T):                                    # static unroll (T is small)
        mask = (lengths > t).astype(jnp.float32)          # prefix mask for step t
        acc = acc + video_ref[0, t] * mask
    img = acc * 0.125                                     # (tr, 128)

    sig_shot = sig_ref[0]
    sig_read = sig_ref[1]

    # Combined single Gaussian draw:
    #   shot + read  ~  N(0, img*sig_shot^2 + sig_read^2)
    std = jnp.sqrt(jnp.maximum(img, 0.0) * (sig_shot * sig_shot)
                   + sig_read * sig_read)
    noisy = img + std * noise_ref[0]

    out_ref[0] = jnp.clip(noisy, 0.0, 1.0).astype(out_ref.dtype)


def uniform_shutter_forward(video, lengths, sig, noise, *,
                            vmem_budget_bytes=8 * 1024 * 1024):
    """video: (N, T, H, W) f32; lengths: (H, W) int (1..T); sig: (2,) f32 =
    [sig_shot, sig_read]; noise: (N, H, W) f32 standard-normal draw.
    Returns (N, 1, H, W) f32."""
    N, T, H, W = video.shape
    assert lengths.shape == (H, W)
    assert noise.shape == (N, H, W)
    P = H * W
    # TODO(synk): pad the pixel axis if H*W is not a multiple of 128.
    assert P % 128 == 0, "H*W must be a multiple of 128 (pad otherwise)"
    rows = P // 128

    # Lane+sublane dense layout: pixel axis -> (rows, 128).
    video_f = video.reshape(N, T, rows, 128).astype(jnp.float32)
    len_f = lengths.reshape(rows, 128).astype(jnp.int32)
    noise_f = noise.reshape(N, rows, 128).astype(jnp.float32)

    # Row tile from a VMEM byte budget: per step, double-buffered blocks are
    #   video (T rows) + lengths + noise + out  = (T + 3) * 128 * 4 bytes per row, x2.
    bytes_per_row = 2 * (T + 3) * 128 * 4
    budget_rows = max(8, (vmem_budget_bytes // bytes_per_row) // 8 * 8)
    if rows <= budget_rows:
        tile_rows = rows                       # full extent (always legal)
    else:
        tile_rows = 8
        for cand in range(budget_rows, 7, -8): # largest multiple-of-8 divisor <= budget
            if rows % cand == 0:
                tile_rows = cand
                break
    grid = (N, rows // tile_rows)              # >= 2 parallel steps whenever N >= 2

    cost = pl.CostEstimate(
        flops=int(N * (2 * T + 8) * P),
        transcendentals=int(N * P),            # one sqrt per output pixel
        bytes_accessed=int(4 * (N * T * P + P + N * P + N * P)),
    )

    out = pl.pallas_call(
        _uniform_shutter_kernel,
        out_shape=jax.ShapeDtypeStruct((N, rows, 128), jnp.float32),
        grid_spec=pltpu.PrefetchScalarGridSpec(
            num_scalar_prefetch=0,
            grid=grid,
            in_specs=[
                pl.BlockSpec(memory_space=pltpu.MemorySpace.SMEM),       # sig (2,) f32
                pl.BlockSpec((1, T, tile_rows, 128),
                             lambda n, r: (n, 0, r, 0)),                 # video
                pl.BlockSpec((tile_rows, 128), lambda n, r: (r, 0)),     # lengths
                pl.BlockSpec((1, tile_rows, 128), lambda n, r: (n, r, 0)),  # noise
            ],
            out_specs=pl.BlockSpec((1, tile_rows, 128), lambda n, r: (n, r, 0)),
        ),
        compiler_params=pltpu.CompilerParams(
            # Batch and pixel-row tiles are fully independent -> megacore sharding.
            dimension_semantics=("parallel", "parallel"),
            vmem_limit_bytes=32 * 1024 * 1024,
        ),
        cost_estimate=cost,
    )(sig, video_f, len_f, noise_f)

    return out.reshape(N, 1, H, W)


if __name__ == "__main__":
    # block_size = (T, H, W) ; batch of videos (N, T, H, W)
    T, H, W = 8, 16, 16
    N = 2

    key = jax.random.PRNGKey(0)
    k_len, k_vid, k_sshot, k_sread, k_noise = jax.random.split(key, 5)

    # --- Uniform.__init__ : lengths ~ randint(1, T+1, (H, W)); shutter derived mask ---
    lengths = jax.random.randint(k_len, (H, W), 1, T + 1, dtype=jnp.int32)
    # shutter[t, y, x] = 1  iff  t < lengths[y, x]  (equivalent to the PyTorch loop)
    shutter = (jnp.arange(T, dtype=jnp.int32)[:, None, None] < lengths[None]
               ).astype(jnp.float32)

    # --- example input video block ---
    video = jax.random.uniform(k_vid, (N, T, H, W), dtype=jnp.float32)

    # --- noise scale parameters (test=False path of add_noise) ---
    sig_shot_min, sig_shot_max = 1e-4, 1e-2
    sig_read_min, sig_read_max = 1e-3, 3e-2
    u_shot = jax.random.uniform(k_sshot, (), dtype=jnp.float32)
    u_read = jax.random.uniform(k_sread, (), dtype=jnp.float32)
    sig_shot = (sig_shot_min - sig_shot_max) * u_shot + sig_shot_max
    sig_read = (sig_read_min - sig_read_max) * u_read + sig_read_max
    sig = jnp.stack([sig_shot, sig_read]).astype(jnp.float32)

    # --- single standard-normal draw (combined shot+read Gaussian) ---
    noise = jax.random.normal(k_noise, (N, H, W), dtype=jnp.float32)

    # Pure-JAX noiseless reference (lengths divide/multiply cancels to *1/8).
    img_ref = jnp.sum(video * shutter[None], axis=1) * 0.125            # (N, H, W)

    # 1) Deterministic datapath check: zero sigmas -> exact match vs reference.
    out0 = uniform_shutter_forward(video, lengths,
                                   jnp.zeros((2,), jnp.float32), noise)
    out0 = jax.block_until_ready(out0)
    assert out0.shape == (N, 1, H, W)
    assert bool(jnp.allclose(out0[:, 0], jnp.clip(img_ref, 0.0, 1.0),
                             atol=1e-5, rtol=1e-5)), "datapath mismatch"

    # 2) Full forward with random sigmas: exact match vs combined-Gaussian reference.
    std_ref = jnp.sqrt(jnp.maximum(img_ref, 0.0) * sig_shot * sig_shot
                       + sig_read * sig_read)
    full_ref = jnp.clip(img_ref + std_ref * noise, 0.0, 1.0)
    out = uniform_shutter_forward(video, lengths, sig, noise)
    out = jax.block_until_ready(out)
    assert out.shape == (N, 1, H, W)
    assert bool(jnp.all(jnp.isfinite(out)))
    assert bool(jnp.all((out >= 0.0) & (out <= 1.0)))
    assert bool(jnp.allclose(out[:, 0], full_ref, atol=1e-5, rtol=1e-5)), \
        "noisy forward mismatch"
    assert float(jnp.max(jnp.abs(out[:, 0] - img_ref))) > 0.0, "noise was not injected"

    print("KERNEL_OK")
</pallas_src>

<mosaic_0001>
module attributes {stable_mosaic.version = 11 : i64} {
  func.func @_uniform_shutter_kernel(%arg0: i32, %arg1: i32, %arg2: memref<2xf32, #tpu.memory_space<smem>>, %arg3: memref<1x8x2x128xf32, #tpu.memory_space<vmem>>, %arg4: memref<2x128xi32, #tpu.memory_space<vmem>>, %arg5: memref<1x2x128xf32, #tpu.memory_space<vmem>>, %arg6: memref<1x2x128xf32, #tpu.memory_space<vmem>>) attributes {dimension_semantics = [#tpu.dimension_semantics<parallel>, #tpu.dimension_semantics<parallel>], iteration_bounds = array<i64: 2, 1>, scalar_prefetch = 0 : i64, scratch_operands = 0 : i64, tpu.core_type = #tpu.core_type<tc>, window_params = [{transform_indices = @transform_0, window_bounds = array<i64: 2>}, {transform_indices = @transform_1, window_bounds = array<i64: 1, 8, 2, 128>}, {transform_indices = @transform_2, window_bounds = array<i64: 2, 128>}, {transform_indices = @transform_3, window_bounds = array<i64: 1, 2, 128>}, {transform_indices = @transform_4, window_bounds = array<i64: 1, 2, 128>}]} {
    %c0 = arith.constant 0 : index
    %c0_0 = arith.constant 0 : index
    %0 = vector.load %arg4[%c0, %c0_0] : memref<2x128xi32, #tpu.memory_space<vmem>>, vector<2x128xi32>
    %cst = arith.constant 0.000000e+00 : f32
    %1 = vector.broadcast %cst : f32 to vector<2x128xf32>
    %c0_i32 = arith.constant 0 : i32
    %2 = vector.broadcast %c0_i32 : i32 to vector<2x128xi32>
    %3 = arith.cmpi sgt, %0, %2 : vector<2x128xi32>
    %4 = arith.extui %3 : vector<2x128xi1> to vector<2x128xi32>
    %5 = arith.sitofp %4 : vector<2x128xi32> to vector<2x128xf32>
    %c0_1 = arith.constant 0 : index
    %c0_2 = arith.constant 0 : index
    %c0_3 = arith.constant 0 : index
    %c0_4 = arith.constant 0 : index
    %6 = vector.load %arg3[%c0_1, %c0_2, %c0_3, %c0_4] : memref<1x8x2x128xf32, #tpu.memory_space<vmem>>, vector<1x1x2x128xf32>
    %7 = vector.shape_cast %6 : vector<1x1x2x128xf32> to vector<2x128xf32>
    %8 = arith.mulf %7, %5 : vector<2x128xf32>
    %9 = arith.addf %1, %8 : vector<2x128xf32>
    %c1_i32 = arith.constant 1 : i32
    %10 = vector.broadcast %c1_i32 : i32 to vector<2x128xi32>
    %11 = arith.cmpi sgt, %0, %10 : vector<2x128xi32>
    %12 = arith.extui %11 : vector<2x128xi1> to vector<2x128xi32>
    %13 = arith.sitofp %12 : vector<2x128xi32> to vector<2x128xf32>
    %c0_5 = arith.constant 0 : index
    %c1 = arith.constant 1 : index
    %c0_6 = arith.constant 0 : index
    %c0_7 = arith.constant 0 : index
    %14 = vector.load %arg3[%c0_5, %c1, %c0_6, %c0_7] : memref<1x8x2x128xf32, #tpu.memory_space<vmem>>, vector<1x1x2x128xf32>
    %15 = vector.shape_cast %14 : vector<1x1x2x128xf32> to vector<2x128xf32>
    %16 = arith.mulf %15, %13 : vector<2x128xf32>
    %17 = arith.addf %9, %16 : vector<2x128xf32>
    %c2_i32 = arith.constant 2 : i32
    %18 = vector.broadcast %c2_i32 : i32 to vector<2x128xi32>
    %19 = arith.cmpi sgt, %0, %18 : vector<2x128xi32>
    %20 = arith.extui %19 : vector<2x128xi1> to vector<2x128xi32>
    %21 = arith.sitofp %20 : vector<2x128xi32> to vector<2x128xf32>
    %c0_8 = arith.constant 0 : index
    %c2 = arith.constant 2 : index
    %c0_9 = arith.constant 0 : index
    %c0_10 = arith.constant 0 : index
    %22 = vector.load %arg3[%c0_8, %c2, %c0_9, %c0_10] : memref<1x8x2x128xf32, #tpu.memory_space<vmem>>, vector<1x1x2x128xf32>
    %23 = vector.shape_cast %22 : vector<1x1x2x128xf32> to vector<2x128xf32>
    %24 = arith.mulf %23, %21 : vector<2x128xf32>
    %25 = arith.addf %17, %24 : vector<2x128xf32>
    %c3_i32 = arith.constant 3 : i32
    %26 = vector.broadcast %c3_i32 : i32 to vector<2x128xi32>
    %27 = arith.cmpi sgt, %0, %26 : vector<2x128xi32>
    %28 = arith.extui %27 : vector<2x128xi1> to vector<2x128xi32>
    %29 = arith.sitofp %28 : vector<2x128xi32> to vector<2x128xf32>
    %c0_11 = arith.constant 0 : index
    %c3 = arith.constant 3 : index
    %c0_12 = arith.constant 0 : index
    %c0_13 = arith.constant 0 : index
    %30 = vector.load %arg3[%c0_11, %c3, %c0_12, %c0_13] : memref<1x8x2x128xf32, #tpu.memory_space<vmem>>, vector<1x1x2x128xf32>
    %31 = vector.shape_cast %30 : vector<1x1x2x128xf32> to vector<2x128xf32>
    %32 = arith.mulf %31, %29 : vector<2x128xf32>
    %33 = arith.addf %25, %32 : vector<2x128xf32>
    %c4_i32 = arith.constant 4 : i32
    %34 = vector.broadcast %c4_i32 : i32 to vector<2x128xi32>
    %35 = arith.cmpi sgt, %0, %34 : vector<2x128xi32>
    %36 = arith.extui %35 : vector<2x128xi1> to vector<2x128xi32>
    %37 = arith.sitofp %36 : vector<2x128xi32> to vector<2x128xf32>
    %c0_14 = arith.constant 0 : index
    %c4 = arith.constant 4 : index
    %c0_15 = arith.constant 0 : index
    %c0_16 = arith.constant 0 : index
    %38 = vector.load %arg3[%c0_14, %c4, %c0_15, %c0_16] : memref<1x8x2x128xf32, #tpu.memory_space<vmem>>, vector<1x1x2x128xf32>
    %39 = vector.shape_cast %38 : vector<1x1x2x128xf32> to vector<2x128xf32>
    %40 = arith.mulf %39, %37 : vector<2x128xf32>
    %41 = arith.addf %33, %40 : vector<2x128xf32>
    %c5_i32 = arith.constant 5 : i32
    %42 = vector.broadcast %c5_i32 : i32 to vector<2x128xi32>
    %43 = arith.cmpi sgt, %0, %42 : vector<2x128xi32>
    %44 = arith.extui %43 : vector<2x128xi1> to vector<2x128xi32>
    %45 = arith.sitofp %44 : vector<2x128xi32> to vector<2x128xf32>
    %c0_17 = arith.constant 0 : index
    %c5 = arith.constant 5 : index
    %c0_18 = arith.constant 0 : index
    %c0_19 = arith.constant 0 : index
    %46 = vector.load %arg3[%c0_17, %c5, %c0_18, %c0_19] : memref<1x8x2x128xf32, #tpu.memory_space<vmem>>, vector<1x1x2x128xf32>
    %47 = vector.shape_cast %46 : vector<1x1x2x128xf32> to vector<2x128xf32>
    %48 = arith.mulf %47, %45 : vector<2x128xf32>
    %49 = arith.addf %41, %48 : vector<2x128xf32>
    %c6_i32 = arith.constant 6 : i32
    %50 = vector.broadcast %c6_i32 : i32 to vector<2x128xi32>
    %51 = arith.cmpi sgt, %0, %50 : vector<2x128xi32>
    %52 = arith.extui %51 : vector<2x128xi1> to vector<2x128xi32>
    %53 = arith.sitofp %52 : vector<2x128xi32> to vector<2x128xf32>
    %c0_20 = arith.constant 0 : index
    %c6 = arith.constant 6 : index
    %c0_21 = arith.constant 0 : index
    %c0_22 = arith.constant 0 : index
    %54 = vector.load %arg3[%c0_20, %c6, %c0_21, %c0_22] : memref<1x8x2x128xf32, #tpu.memory_space<vmem>>, vector<1x1x2x128xf32>
    %55 = vector.shape_cast %54 : vector<1x1x2x128xf32> to vector<2x128xf32>
    %56 = arith.mulf %55, %53 : vector<2x128xf32>
    %57 = arith.addf %49, %56 : vector<2x128xf32>
    %c7_i32 = arith.constant 7 : i32
    %58 = vector.broadcast %c7_i32 : i32 to vector<2x128xi32>
    %59 = arith.cmpi sgt, %0, %58 : vector<2x128xi32>
    %60 = arith.extui %59 : vector<2x128xi1> to vector<2x128xi32>
    %61 = arith.sitofp %60 : vector<2x128xi32> to vector<2x128xf32>
    %c0_23 = arith.constant 0 : index
    %c7 = arith.constant 7 : index
    %c0_24 = arith.constant 0 : index
    %c0_25 = arith.constant 0 : index
    %62 = vector.load %arg3[%c0_23, %c7, %c0_24, %c0_25] : memref<1x8x2x128xf32, #tpu.memory_space<vmem>>, vector<1x1x2x128xf32>
    %63 = vector.shape_cast %62 : vector<1x1x2x128xf32> to vector<2x128xf32>
    %64 = arith.mulf %63, %61 : vector<2x128xf32>
    %65 = arith.addf %57, %64 : vector<2x128xf32>
    %cst_26 = arith.constant 1.250000e-01 : f32
    %66 = vector.broadcast %cst_26 : f32 to vector<2x128xf32>
    %67 = arith.mulf %65, %66 : vector<2x128xf32>
    %c0_27 = arith.constant 0 : index
    %68 = memref.load %arg2[%c0_27] : memref<2xf32, #tpu.memory_space<smem>>
    %c1_28 = arith.constant 1 : index
    %69 = memref.load %arg2[%c1_28] : memref<2xf32, #tpu.memory_space<smem>>
    %cst_29 = arith.constant 0.000000e+00 : f32
    %70 = vector.broadcast %cst_29 : f32 to vector<2x128xf32>
    %71 = arith.maximumf %67, %70 : vector<2x128xf32>
    %72 = arith.mulf %68, %68 : f32
    %73 = vector.broadcast %72 : f32 to vector<2x128xf32>
    %74 = arith.mulf %71, %73 : vector<2x128xf32>
    %75 = arith.mulf %69, %69 : f32
    %76 = vector.broadcast %75 : f32 to vector<2x128xf32>
    %77 = arith.addf %74, %76 : vector<2x128xf32>
    %78 = math.sqrt %77 : vector<2x128xf32>
    %c0_30 = arith.constant 0 : index
    %c0_31 = arith.constant 0 : index
    %c0_32 = arith.constant 0 : index
    %79 = vector.load %arg5[%c0_30, %c0_31, %c0_32] : memref<1x2x128xf32, #tpu.memory_space<vmem>>, vector<1x2x128xf32>
    %80 = vector.shape_cast %79 : vector<1x2x128xf32> to vector<2x128xf32>
    %81 = arith.mulf %78, %80 : vector<2x128xf32>
    %82 = arith.addf %67, %81 : vector<2x128xf32>
    %cst_33 = arith.constant 0.000000e+00 : f32
    %cst_34 = arith.constant 1.000000e+00 : f32
    %83 = vector.broadcast %cst_33 : f32 to vector<2x128xf32>
    %84 = arith.maximumf %83, %82 : vector<2x128xf32>
    %85 = vector.broadcast %cst_34 : f32 to vector<2x128xf32>
    %86 = arith.minimumf %85, %84 : vector<2x128xf32>
    %c0_35 = arith.constant 0 : index
    %c0_36 = arith.constant 0 : index
    %c0_37 = arith.constant 0 : index
    %87 = vector.load %arg6[%c0_35, %c0_36, %c0_37] : memref<1x2x128xf32, #tpu.memory_space<vmem>>, vector<1x2x128xf32>
    %88 = vector.shape_cast %87 : vector<1x2x128xf32> to vector<2x128xf32>
    %89 = vector.shape_cast %86 : vector<2x128xf32> to vector<1x2x128xf32>
    tpu.vector_store %arg6[%c0_35, %c0_36, %c0_37], %89 {strides = array<i32>} : memref<1x2x128xf32, #tpu.memory_space<vmem>>, vector<1x2x128xf32>,
    return
  }
  func.func @transform_0(%arg0: i32, %arg1: i32) -> i32 {
    %c0_i32 = arith.constant 0 : i32
    %c0_i32_0 = arith.constant 0 : i32
    return %c0_i32 : i32
  }
  func.func @transform_1(%arg0: i32, %arg1: i32) -> (i32, i32, i32, i32) {
    %c0_i32 = arith.constant 0 : i32
    %c0_i32_0 = arith.constant 0 : i32
    %c0_i32_1 = arith.constant 0 : i32
    return %arg0, %c0_i32, %arg1, %c0_i32_0 : i32, i32, i32, i32
  }
  func.func @transform_2(%arg0: i32, %arg1: i32) -> (i32, i32) {
    %c0_i32 = arith.constant 0 : i32
    %c0_i32_0 = arith.constant 0 : i32
    return %arg1, %c0_i32 : i32, i32
  }
  func.func @transform_3(%arg0: i32, %arg1: i32) -> (i32, i32, i32) {
    %c0_i32 = arith.constant 0 : i32
    %c0_i32_0 = arith.constant 0 : i32
    return %arg0, %arg1, %c0_i32 : i32, i32, i32
  }
  func.func @transform_4(%arg0: i32, %arg1: i32) -> (i32, i32, i32) {
    %c0_i32 = arith.constant 0 : i32
    %c0_i32_0 = arith.constant 0 : i32
    return %arg0, %arg1, %c0_i32 : i32, i32, i32
  }
}

</mosaic_0001>

<llo_original>
// kernel: tpu_custom_call.1
$region0: #{tpu_custom_call.1}
  #allocation0 [shape = 'u32[]', space=smem, size = 0x4, offset = 0x4, fixed_abs, tag = 'smem constant byte address 0x4 - core index']
  #allocation1 [shape = 'u32[72,128]{1,0:T(1,128)}', space=vmem, size = 0x9000, scoped, tag = 'internal scratch']
  %s0 = inlined_call_operand.hbm [shape: f32[2], index: 0, kind: input, shape index: {}]
  %s1 = inlined_call_operand.hbm [shape: f32[2,8,2,128], index: 1, kind: input, shape index: {}]
  %s2 = inlined_call_operand.hbm [shape: s32[2,128], index: 2, kind: input, shape index: {}]
  %s3 = inlined_call_operand.hbm [shape: f32[2,2,128], index: 3, kind: input, shape index: {}]
  %s4 = inlined_call_operand.hbm [shape: f32[2,2,128], index: 4, kind: output, shape index: {}]
  %s5 = sld [smem:[#allocation0]]
  $region65: #{tpu_custom_call.1} parent=0
    _
  %s7 = ssub.s32 1, %s5
  %s8 = scalar_select 0, %s7, %s5
  $region1: #{tpu_custom_call.1} parent=0
    #allocation2 [shape = 'u8[512]{0}', space=smem, size = 0x200, scoped, tag = 'input window, operand 0, single buffered']
    #allocation3 [shape = 's32[2]{0}', space=sflag, size = 0x8, scoped, tag = 'scoped memory for tpu_custom_call.1']
    #allocation4 [shape = 's32[2]{0}', space=sflag, size = 0x8, scoped, tag = 'scoped memory for tpu_custom_call.1']
    #allocation5 [shape = 's32[2]{0}', space=sflag, size = 0x8, scoped, tag = 'scoped memory for tpu_custom_call.1']
    #allocation6 [shape = 'u8[16384]{0}', space=vmem, size = 0x4000, scoped, tag = 'input window, operand 1']
    #allocation7 [shape = 'u8[1024]{0}', space=vmem, size = 0x400, scoped, tag = 'input window, operand 2, single buffered']
    #allocation8 [shape = 's32[1]{0}', space=sflag, size = 0x4, scoped, tag = 'scoped memory for tpu_custom_call.1']
    #allocation9 [shape = 'u8[2048]{0}', space=vmem, size = 0x800, scoped, tag = 'input window, operand 3']
    #allocation10 [shape = 'u8[2048]{0}', space=vmem, size = 0x800, scoped, tag = 'output window, operand 0']
    %9 = vsyncpa [#allocation5], 0
    %10 = vsyncpa [#allocation3], 0
    %s11 = scalar_lea.sflag [#allocation3], 1
    %12 = vsyncpa %s11, 0
    %13 = vsyncpa [#allocation8], 0
    %14 = vsyncpa [#allocation4], 0
    %s15 = scalar_lea.sflag [#allocation4], 1
    %16 = vsyncpa %s15, 0
    loop: start=0, step=1, limit=4
    $region2: #{tpu_custom_call.1} parent=1 // loop_pre_header
      _
    $region3: #{tpu_custom_call.1} parent=1 // loop_header
      %s18 = sphi 0, %s22
      %p19 = scmp.ge.s32.totalorder %s18, 4
      %s25 = sphi 0, %s37
      %s26 = sphi 0, %s33
      %s27 = sphi 0, %s25
      %s28 = sphi 0, %s26
      %s29 = sphi 0, %s27
      %s30 = sphi 0, %s28
      %s38 = sphi 0, %s38
      %s40 = sphi 0, %s38
      %s41 = sphi 0, %s40
      %s55 = sphi 0, %s41
      %s63 = sphi 0, %s65
      %s66 = sphi 0, %s63
      %s67 = sphi 0, %s66
      %s83 = sphi 0, %s67
      %s89 = sphi 0, %s91
      %s92 = sphi 0, %s89
      %s93 = sphi 0, %s92
      %s109 = sphi 0, %s93
      %s117 = sphi 0, %s119
      %s120 = sphi 0, %s117
      %s121 = sphi 0, %s120
      %s137 = sphi 0, %s121
      %s145 = sphi 0, %s147
      %s148 = sphi 0, %s145
      %s149 = sphi 0, %s148
      %s165 = sphi 0, %s149
    $region4: #{tpu_custom_call.1} parent=1 // loop_header_branch
      %21 = sbr.rel (%p19) target = $region8
    $region5: #{tpu_custom_call.1} parent=1 // loop_body
      %s23 = ssub.s32 %s18, 1
      %s24 = ssub.s32 %s18, 2
      %s31 = sadd.s32 1, %s26
      %p32 = scmp.ge.s32.totalorder %s31, 1
      %s33 = scalar_select %p32, 0, %s31
      %s34 = sadd.s32 1, %s25
      %s35 = scalar_select %p32, %s34, %s25
      %p36 = scmp.ge.s32.totalorder %s35, 2
      %s37 = scalar_select %p36, 0, %s35
      %s39 = sadd.s32 %s38, 1
      %p42 = scmp.eq.s32.totalorder %s18, 1
      %p43 = scmp.ne.s32.totalorder %s38, %s40
      %p44 = scmp.eq.s32.totalorder %s18, 0
      %p45 = por %p43, %p44
      %p46 = scmp.ne.s32.totalorder %s38, %s40
      %p47 = scmp.eq.s32.totalorder %s23, 1
      %p48 = por %p46, %p47
      %p49 = scmp.ne.s32.totalorder %s40, %s41
      %p50 = scmp.eq.s32.totalorder %s23, 0
      %p51 = por %p49, %p50
      %p52 = scmp.ne.s32.totalorder %s40, %s41
      %p53 = scmp.eq.s32.totalorder %s24, 1
      %p54 = por %p52, %p53
      %p56 = scmp.ne.s32.totalorder %s41, %s55
      %p57 = scmp.eq.s32.totalorder %s24, 0
      %p58 = por %p56, %p57
      %s59 = ssub.s32 %s25, %s37
      %s60 = ssub.s32 %s26, %s33
      %s61 = sor.u32 %s59, %s60
      %p62 = scmp.eq.s32.totalorder %s61, 0
      %s64 = sadd.s32 %s63, 1
      %s65 = scalar_select %p62, %s63, %s64
      %p68 = pneg %p62
      %p69 = scmp.eq.s32.totalorder %s18, 1
      %p70 = por %p68, %p69
      %p71 = scmp.ne.s32.totalorder %s63, %s66
      %p72 = scmp.eq.s32.totalorder %s18, 0
      %p73 = por %p71, %p72
      %p74 = scmp.ne.s32.totalorder %s63, %s66
      %p75 = scmp.eq.s32.totalorder %s23, 1
      %p76 = por %p74, %p75
      %p77 = scmp.ne.s32.totalorder %s66, %s67
      %p78 = scmp.eq.s32.totalorder %s23, 0
      %p79 = por %p77, %p78
      %p80 = scmp.ne.s32.totalorder %s66, %s67
      %p81 = scmp.eq.s32.totalorder %s24, 1
      %p82 = por %p80, %p81
      %p84 = scmp.ne.s32.totalorder %s67, %s83
      %p85 = scmp.eq.s32.totalorder %s24, 0
      %p86 = por %p84, %p85
      %s87 = ssub.s32 %s26, %s33
      %p88 = scmp.eq.s32.totalorder %s87, 0
      %s90 = sadd.s32 %s89, 1
      %s91 = scalar_select %p88, %s89, %s90
      %p94 = pneg %p88
      %p95 = scmp.eq.s32.totalorder %s18, 1
      %p96 = por %p94, %p95
      %p97 = scmp.ne.s32.totalorder %s89, %s92
      %p98 = scmp.eq.s32.totalorder %s18, 0
      %p99 = por %p97, %p98
      %p100 = scmp.ne.s32.totalorder %s89, %s92
      %p101 = scmp.eq.s32.totalorder %s23, 1
      %p102 = por %p100, %p101
      %p103 = scmp.ne.s32.totalorder %s92, %s93
      %p104 = scmp.eq.s32.totalorder %s23, 0
      %p105 = por %p103, %p104
      %p106 = scmp.ne.s32.totalorder %s92, %s93
      %p107 = scmp.eq.s32.totalorder %s24, 1
      %p108 = por %p106, %p107
      %p110 = scmp.ne.s32.totalorder %s93, %s109
      %p111 = scmp.eq.s32.totalorder %s24, 0
      %p112 = por %p110, %p111
      %s113 = ssub.s32 %s25, %s37
      %s114 = ssub.s32 %s26, %s33
      %s115 = sor.u32 %s113, %s114
      %p116 = scmp.eq.s32.totalorder %s115, 0
      %s118 = sadd.s32 %s117, 1
      %s119 = scalar_select %p116, %s117, %s118
      %p122 = pneg %p116
      %p123 = scmp.eq.s32.totalorder %s18, 1
      %p124 = por %p122, %p123
      %p125 = scmp.ne.s32.totalorder %s117, %s120
      %p126 = scmp.eq.s32.totalorder %s18, 0
      %p127 = por %p125, %p126
      %p128 = scmp.ne.s32.totalorder %s117, %s120
      %p129 = scmp.eq.s32.totalorder %s23, 1
      %p130 = por %p128, %p129
      %p131 = scmp.ne.s32.totalorder %s120, %s121
      %p132 = scmp.eq.s32.totalorder %s23, 0
      %p133 = por %p131, %p132
      %p134 = scmp.ne.s32.totalorder %s120, %s121
      %p135 = scmp.eq.s32.totalorder %s24, 1
      %p136 = por %p134, %p135
      %p138 = scmp.ne.s32.totalorder %s121, %s137
      %p139 = scmp.eq.s32.totalorder %s24, 0
      %p140 = por %p138, %p139
      %s141 = ssub.s32 %s25, %s37
      %s142 = ssub.s32 %s26, %s33
      %s143 = sor.u32 %s141, %s142
      %p144 = scmp.eq.s32.totalorder %s143, 0
      %s146 = sadd.s32 %s145, 1
      %s147 = scalar_select %p144, %s145, %s146
      %p150 = pneg %p144
      %p151 = scmp.eq.s32.totalorder %s18, 1
      %p152 = por %p150, %p151
      %p153 = scmp.ne.s32.totalorder %s145, %s148
      %p154 = scmp.eq.s32.totalorder %s18, 0
      %p155 = por %p153, %p154
      %p156 = scmp.ne.s32.totalorder %s145, %s148
      %p157 = scmp.eq.s32.totalorder %s23, 1
      %p158 = por %p156, %p157
      %p159 = scmp.ne.s32.totalorder %s148, %s149
      %p160 = scmp.eq.s32.totalorder %s23, 0
      %p161 = por %p159, %p160
      %p162 = scmp.ne.s32.totalorder %s148, %s149
      %p163 = scmp.eq.s32.totalorder %s24, 1
      %p164 = por %p162, %p163
      %p166 = scmp.ne.s32.totalorder %s149, %s165
      %p167 = scmp.eq.s32.totalorder %s24, 0
      %p168 = por %p166, %p167
      %p169 = scmp.le.s32.totalorder 1, %s18
      %p170 = scmp.lt.s32.totalorder %s18, 3
      %p171 = pnand %p169, %p170
      %p172 = pneg %p171
      // Predicated region
      $region9: #{tpu_custom_call.1} parent=5 // pred_check
        _
      $region10: #{tpu_custom_call.1} parent=5 // pred_check_branch
        %174 = sbr.rel (%p171) target = $region12
      $region11: #{tpu_custom_call.1} parent=5 // pred_region
        %s175 = ssub.s32 %s18, 1
        // Predicated region
        $region13: #{tpu_custom_call.1} parent=11 // pred_check
          %p176 = pneg %p51
        $region14: #{tpu_custom_call.1} parent=11 // pred_check_branch
          %178 = sbr.rel (%p176) target = $region16
        $region15: #{tpu_custom_call.1} parent=11 // pred_region
          %180 = vsyncadd [#allocation5], 0
          %s182 = sshll.u32 %s0, 4
          %s183 = int_to_ptr.hbm [resolvable:$true] %s182
          %185 = dma.hbm_to_smem %s183, 16, [#allocation2], [#allocation5]
        $region16: #{tpu_custom_call.1} parent=11 // pred_fallthru
          _
        // Predicated region
        $region17: #{tpu_custom_call.1} parent=11 // pred_check
          %p186 = pneg %p105
        $region18: #{tpu_custom_call.1} parent=11 // pred_check_branch
          %188 = sbr.rel (%p186) target = $region20
        $region19: #{tpu_custom_call.1} parent=11 // pred_region
          %190 = vsyncadd [#allocation8], 0
          %s191 = smul.addr %s28, 2
          %s192 = scalar_lea.hbm %s2, %s191
          %s194 = sshll.u32 %s192, 4
          %s195 = int_to_ptr.hbm [resolvable:$true] %s194
          %s196 = sshll.u32 [#allocation7], 4
          %s197 = int_to_ptr.vmem [resolvable:$true] %s196
          %199 = dma.hbm_to_vmem [thread:$0]  %s195, 32, %s197, [#allocation8]
        $region20: #{tpu_custom_call.1} parent=11 // pred_fallthru
          _
      $region12: #{tpu_custom_call.1} parent=5 // pred_fallthru
        _
      %p200 = scmp.lt.s32.totalorder %s18, 2
      // Predicated region
      $region21: #{tpu_custom_call.1} parent=5 // pred_check
        %p201 = pneg %p200
      $region22: #{tpu_custom_call.1} parent=5 // pred_check_branch
        %203 = sbr.rel (%p201) target = $region24
      $region23: #{tpu_custom_call.1} parent=5 // pred_region
        // Predicated region
        $region25: #{tpu_custom_call.1} parent=23 // pred_check
          %p204 = pneg %p73
        $region26: #{tpu_custom_call.1} parent=23 // pred_check_branch
          %206 = sbr.rel (%p204) target = $region28
        $region27: #{tpu_custom_call.1} parent=23 // pred_region
          %s207 = sand.u32 %s18, 1
          %s208 = scalar_lea.sflag [#allocation3], %s207
          %s209 = sand.u32 %s63, 1
          %s210 = smul.addr %s209, 16
          %s211 = scalar_lea.vmem [#allocation6], %s210
          %213 = vsyncadd %s208, 0
          %s214 = smul.addr %s25, 8
          %s215 = sadd.s32 %s26, %s214
          %s216 = smul.addr %s215, 2
          %s217 = scalar_lea.hbm %s1, %s216
          %s218 = sshll.u32 %s217, 4
          %s219 = int_to_ptr.hbm [resolvable:$true] %s218
          %s220 = sshll.u32 %s211, 4
          %s221 = int_to_ptr.vmem [resolvable:$true] %s220
          %226 = dma.hbm_to_vmem [thread:$0]  %s219, 256, %s221, %s208, 32, 32, 2
        $region28: #{tpu_custom_call.1} parent=23 // pred_fallthru
          _
        // Predicated region
        $region29: #{tpu_custom_call.1} parent=23 // pred_check
          %p227 = pneg %p127
        $region30: #{tpu_custom_call.1} parent=23 // pred_check_branch
          %229 = sbr.rel (%p227) target = $region32
        $region31: #{tpu_custom_call.1} parent=23 // pred_region
          %s230 = sand.u32 %s18, 1
          %s231 = scalar_lea.sflag [#allocation3], %s230
          %s232 = sand.u32 %s117, 1
          %s233 = smul.addr %s232, 2
          %s234 = scalar_lea.vmem [#allocation9], %s233
          %236 = vsyncadd %s231, 0
          %s237 = sadd.s32 %s26, %s25
          %s238 = smul.addr %s237, 2
          %s239 = scalar_lea.hbm %s3, %s238
          %s241 = sshll.u32 %s239, 4
          %s242 = int_to_ptr.hbm [resolvable:$true] %s241
          %s243 = sshll.u32 %s234, 4
          %s244 = int_to_ptr.vmem [resolvable:$true] %s243
          %246 = dma.hbm_to_vmem [thread:$0]  %s242, 32, %s244, %s231
        $region32: #{tpu_custom_call.1} parent=23 // pred_fallthru
          _
      $region24: #{tpu_custom_call.1} parent=5 // pred_fallthru
        _
      %p247 = scmp.le.s32.totalorder 1, %s18
      %p248 = scmp.lt.s32.totalorder %s18, 3
      %p249 = pnand %p247, %p248
      %p250 = pneg %p249
      // Predicated region
      $region33: #{tpu_custom_call.1} parent=5 // pred_check
        _
      $region34: #{tpu_custom_call.1} parent=5 // pred_check_branch
        %252 = sbr.rel (%p249) target = $region36
      $region35: #{tpu_custom_call.1} parent=5 // pred_region
        %s253 = ssub.s32 %s18, 1
        // Predicated region
        $region37: #{tpu_custom_call.1} parent=35 // pred_check
          %p254 = pneg %p51
        $region38: #{tpu_custom_call.1} parent=35 // pred_check_branch
          %256 = sbr.rel (%p254) target = $region40
        $region39: #{tpu_custom_call.1} parent=35 // pred_region
          %258 = dma.done [#allocation5], 16
        $region40: #{tpu_custom_call.1} parent=35 // pred_fallthru
          _
        %s259 = sand.u32 %s23, 1
        %s260 = scalar_lea.sflag [#allocation3], %s259
        %s261 = sand.u32 %s66, 1
        %s262 = smul.addr %s261, 16
        %s263 = scalar_lea.vmem [#allocation6], %s262
        // Predicated region
        $region41: #{tpu_custom_call.1} parent=35 // pred_check
          %p264 = pneg %p79
        $region42: #{tpu_custom_call.1} parent=35 // pred_check_branch
          %266 = sbr.rel (%p264) target = $region44
        $region43: #{tpu_custom_call.1} parent=35 // pred_region
          %268 = dma.done %s260, 256
        $region44: #{tpu_custom_call.1} parent=35 // pred_fallthru
          _
        // Predicated region
        $region45: #{tpu_custom_call.1} parent=35 // pred_check
          %p269 = pneg %p105
        $region46: #{tpu_custom_call.1} parent=35 // pred_check_branch
          %271 = sbr.rel (%p269) target = $region48
        $region47: #{tpu_custom_call.1} parent=35 // pred_region
          %273 = dma.done [#allocation8], 32
        $region48: #{tpu_custom_call.1} parent=35 // pred_fallthru
          _
        %s274 = sand.u32 %s23, 1
        %s275 = scalar_lea.sflag [#allocation3], %s274
        %s276 = sand.u32 %s120, 1
        %s277 = smul.addr %s276, 2
        %s278 = scalar_lea.vmem [#allocation9], %s277
        // Predicated region
        $region49: #{tpu_custom_call.1} parent=35 // pred_check
          %p279 = pneg %p133
        $region50: #{tpu_custom_call.1} parent=35 // pred_check_branch
          %281 = sbr.rel (%p279) target = $region52
        $region51: #{tpu_custom_call.1} parent=35 // pred_region
          %283 = dma.done %s275, 32
        $region52: #{tpu_custom_call.1} parent=35 // pred_fallthru
          _
        %284 = sfence
        %p285 = pneg %p51
        %p286 = pneg %p48
        %s287 = sand.u32 %s23, 1
        %s288 = scalar_lea.sflag [#allocation3], %s287
        %s289 = sand.u32 %s66, 1
        %s290 = smul.addr %s289, 16
        %s291 = scalar_lea.vmem [#allocation6], %s290
        %p292 = pneg %p79
        %p293 = pneg %p76
        %p294 = pneg %p105
        %p295 = pneg %p102
        %s296 = sand.u32 %s23, 1
        %s297 = scalar_lea.sflag [#allocation3], %s296
        %s298 = sand.u32 %s120, 1
        %s299 = smul.addr %s298, 2
        %s300 = scalar_lea.vmem [#allocation9], %s299
        %p301 = pneg %p133
        %p302 = pneg %p130
        %p303 = pneg %p161
        %p304 = pneg %p158
        %s305 = sand.u32 %s148, 1
        %s306 = scalar_lea.sflag [#allocation4], %s305
        %s307 = sand.u32 %s148, 1
        %s308 = smul.addr %s307, 2
        %s309 = scalar_lea.vmem [#allocation10], %s308
        %v310 = vld [vmem:[#allocation7] sm:$0x3]
        %vm311 = vcmp.gt.s32.totalorder %v310, 0
        %v312 = vsel %vm311, 1, 0
        %v313 = vcvt.s32.f32 %v312
        %v314 = vld [vmem:[%s263] sm:$0x3]
        %v315 = vmul.f32 %v314, %v313
        %v316 = vadd.f32 %v315, 0.0
        %vm317 = vcmp.gt.s32.totalorder %v310, 1
        %v318 = vsel %vm317, 1, 0
        %v319 = vcvt.s32.f32 %v318
        %s320 = scalar_lea.vmem %s263, 2 [#allocation6]
        %v321 = vld [vmem:[%s320] sm:$0x3]
        %v322 = vmul.f32 %v321, %v319
        %v323 = vadd.f32 %v316, %v322
        %vm324 = vcmp.gt.s32.totalorder %v310, 2
        %v325 = vsel %vm324, 1, 0
        %v326 = vcvt.s32.f32 %v325
        %s327 = scalar_lea.vmem %s263, 4 [#allocation6]
        %v328 = vld [vmem:[%s327] sm:$0x3]
        %v329 = vmul.f32 %v328, %v326
        %v330 = vadd.f32 %v323, %v329
        %vm331 = vcmp.gt.s32.totalorder %v310, 3
        %v332 = vsel %vm331, 1, 0
        %v333 = vcvt.s32.f32 %v332
        %s334 = scalar_lea.vmem %s263, 6 [#allocation6]
        %v335 = vld [vmem:[%s334] sm:$0x3]
        %v336 = vmul.f32 %v335, %v333
        %v337 = vadd.f32 %v330, %v336
        %vm338 = vcmp.gt.s32.totalorder %v310, 4
        %v339 = vsel %vm338, 1, 0
        %v340 = vcvt.s32.f32 %v339
        %s341 = scalar_lea.vmem %s263, 8 [#allocation6]
        %v342 = vld [vmem:[%s341] sm:$0x3]
        %v343 = vmul.f32 %v342, %v340
        %v344 = vadd.f32 %v337, %v343
        %vm345 = vcmp.gt.s32.totalorder %v310, 5
        %v346 = vsel %vm345, 1, 0
        %v347 = vcvt.s32.f32 %v346
        %s348 = scalar_lea.vmem %s263, 10 [#allocation6]
        %v349 = vld [vmem:[%s348] sm:$0x3]
        %v350 = vmul.f32 %v349, %v347
        %v351 = vadd.f32 %v344, %v350
        %vm352 = vcmp.gt.s32.totalorder %v310, 6
        %v353 = vsel %vm352, 1, 0
        %v354 = vcvt.s32.f32 %v353
        %s355 = scalar_lea.vmem %s263, 12 [#allocation6]
        %v356 = vld [vmem:[%s355] sm:$0x3]
        %v357 = vmul.f32 %v356, %v354
        %v358 = vadd.f32 %v351, %v357
        %vm359 = vcmp.gt.s32.totalorder %v310, 7
        %v360 = vsel %vm359, 1, 0
        %v361 = vcvt.s32.f32 %v360
        %s362 = scalar_lea.vmem %s263, 14 [#allocation6]
        %v363 = vld [vmem:[%s362] sm:$0x3]
        %v364 = vmul.f32 %v363, %v361
        %v365 = vadd.f32 %v358, %v364
        %v366 = vmul.f32 %v365, 0.125
        %s367 = sld [smem:[#allocation2]]
        %s368 = sld [smem:[#allocation2 + $0x1]]
        %v369 = vmax.f32 %v366, 0.0
        %s370 = smul.f32 %s367, %s367
        %v371 = vstv %s370
        %v372 = vmul.f32 %v369, %v371
        %s373 = smul.f32 %s368, %s368
        %v374 = vstv %s373
        %v375 = vadd.f32 %v372, %v374
        %v376 = vrsqrt.pop %v375
        %v377 = vmul.f32 %v376, %v375
        %v378 = vmul.f32 %v377, %v376
        %v379 = vmul.f32 0.5, %v378
        %v380 = vsub.f32 1.5, %v379
        %v381 = vmul.f32 %v376, %v380
        %v382 = vmul.f32 %v375, %v381
        %vm383 = vcmp.eq.f32.partialorder %v375, inf
        %v384 = vsel %vm383, %v375, %v382
        %vm385 = vcmp.eq.f32.partialorder %v375, 0.0
        %v386 = vand.u32 %v375, 2147483648
        %v387 = vsel %vm385, %v386, %v384
        %v388 = vld [vmem:[%s278] sm:$0x3]
        %v389 = vmul.f32 %v387, %v388
        %v390 = vadd.f32 %v366, %v389
        %v391 = vmax.f32 %v390, 0.0
        %v392 = vmin.f32 %v391, 1.0
        %393 = vst [vmem:[%s309] sm:$0x3] %v392
        %s394 = sand.u32 %s148, 1
        %s395 = scalar_lea.sflag [#allocation4], %s394
        %s396 = sand.u32 %s148, 1
        %s397 = smul.addr %s396, 2
        %s398 = scalar_lea.vmem [#allocation10], %s397
        // Predicated region
        $region53: #{tpu_custom_call.1} parent=35 // pred_check
          %p399 = pneg %p158
        $region54: #{tpu_custom_call.1} parent=35 // pred_check_branch
          %401 = sbr.rel (%p399) target = $region56
        $region55: #{tpu_custom_call.1} parent=35 // pred_region
          %403 = vsyncadd %s395, 0
          %s404 = sadd.s32 %s28, %s27
          %s405 = smul.addr %s404, 2
          %s406 = scalar_lea.hbm %s4, %s405
          %s408 = sshll.u32 %s398, 4
          %s409 = int_to_ptr.vmem [resolvable:$true] %s408
          %s410 = sshll.u32 %s406, 4
          %s411 = int_to_ptr.hbm [resolvable:$true] %s410
          %413 = dma.vmem_to_hbm [thread:$0]  %s409, 32, %s411, %s395
        $region56: #{tpu_custom_call.1} parent=35 // pred_fallthru
          _
      $region36: #{tpu_custom_call.1} parent=5 // pred_fallthru
        _
      %p414 = scmp.le.s32.totalorder 2, %s18
      // Predicated region
      $region57: #{tpu_custom_call.1} parent=5 // pred_check
        %p415 = pneg %p414
      $region58: #{tpu_custom_call.1} parent=5 // pred_check_branch
        %417 = sbr.rel (%p415) target = $region60
      $region59: #{tpu_custom_call.1} parent=5 // pred_region
        %s418 = ssub.s32 %s18, 2
        // Predicated region
        $region61: #{tpu_custom_call.1} parent=59 // pred_check
          %p419 = pneg %p164
        $region62: #{tpu_custom_call.1} parent=59 // pred_check_branch
          %421 = sbr.rel (%p419) target = $region64
        $region63: #{tpu_custom_call.1} parent=59 // pred_region
          %s422 = sand.u32 %s149, 1
          %s423 = scalar_lea.sflag [#allocation4], %s422
          %s424 = sand.u32 %s149, 1
          %s425 = smul.addr %s424, 2
          %s426 = scalar_lea.vmem [#allocation10], %s425
          %428 = dma.done %s423, 32
        $region64: #{tpu_custom_call.1} parent=59 // pred_fallthru
          _
      $region60: #{tpu_custom_call.1} parent=5 // pred_fallthru
        _
    $region6: #{tpu_custom_call.1} parent=1 // loop_footer
      %s22 = sadd.s32 1, %s18
    $region7: #{tpu_custom_call.1} parent=1 // loop_footer_branch
      %17 = sbr.rel target = $region3
    $region8: #{tpu_custom_call.1} parent=1 // loop_exit
      _
    %429 = vsyncpa [#allocation3], 1
    %s430 = scalar_lea.sflag [#allocation3], 1
    %431 = vsyncpa %s430, 1
    %432 = vsyncpa [#allocation8], 1
    %433 = vsyncpa [#allocation4], 1
    %s434 = scalar_lea.sflag [#allocation4], 1
    %435 = vsyncpa %s434, 1
    %436 = vsyncpa [#allocation5], 1
    %s437 = scalar_lea.sflag [#allocation5], 1
    %438 = vsyncpa %s437, 1

</llo_original>
